<compile_context>
chip_gen: v7x
topology: tpu7x:2x2x1
jax: 0.10.0
libtpu: 0.0.40
codegen_flags: <defaults>
</compile_context>

<pallas_src>
import jax
import jax.numpy as jnp
from jax.experimental import pallas as pl
from jax.experimental.pallas import tpu as pltpu


def _round_up(x, m):
    return (x + m - 1) // m * m


def _vmem_cap_bytes():
    """Physical per-core VMEM, with a conservative fallback (v7x = 64 MiB/TC)."""
    try:
        info = pltpu.get_tpu_info()
        cap = getattr(info, "vmem_capacity_bytes", None)
        if cap:
            return int(cap)
    except Exception:
        pass
    return 64 * 1024 * 1024


def _choose_tm(rows, tm_req):
    """Row tile: as large as requested, but keep >= 2 grid steps (v7x has 2 TCs)."""
    tm = max(8, min(int(tm_req), int(rows)))
    if rows >= 16:
        half = _round_up(pl.cdiv(rows, 2), 8)
        if tm > half:
            tm = half
    return _round_up(tm, 8)


# ---------------------------------------------------------------------------
# Kernel
# ---------------------------------------------------------------------------
def residual_block_kernel(x_ref, w1_ref, t1_ref, w2_ref, t2_ref, o_ref):
    x = x_ref[...]                                   # (tm, Dp), streamed dtype
    xf = x.astype(jnp.float32)                       # f32 copy for the residual add
    xc = x.astype(w1_ref.dtype)                      # MXU operand dtype

    # Linear1 (BN1 scale folded into the columns of w1), folded shift, ReLU.
    h1 = jnp.dot(xc, w1_ref[...], preferred_element_type=jnp.float32)
    h1 = jnp.maximum(h1 + t1_ref[...], 0.0)

    # Linear2 (BN2 scale folded into the columns of w2), folded shift.
    h2 = jnp.dot(h1.astype(w2_ref.dtype), w2_ref[...],
                 preferred_element_type=jnp.float32)
    h2 = h2 + t2_ref[...]

    # Residual add + final ReLU (f32), store in the streamed output dtype.
    o_ref[...] = jnp.maximum(xf + h2, 0.0).astype(o_ref.dtype)


# ---------------------------------------------------------------------------
# One-time parameter preparation (hoisted out of the per-call path)
# ---------------------------------------------------------------------------
def prepare_params(params, dim, *, compute_dtype=jnp.bfloat16):
    """Fold BN into the weights, pack block-diagonally to a lane-dense 128-multiple,
    and cast to the MXU compute dtype.  Call ONCE; reuse across forward calls."""
    D = int(dim)
    if D < 128 and 128 % D == 0:
        P = 128 // D                      # rows packed per 128-lane row
    else:
        P = 1                             # fall back to feature-dim zero padding
    Dp = _round_up(max(P * D, 1), 128)

    f32 = jnp.float32
    w1 = params["w1t"] * params["s1"][None, :]        # (D, D), BN1 scale folded in
    w2 = params["w2t"] * params["s2"][None, :]        # (D, D), BN2 scale folded in
    t1 = params["t1"]
    t2 = params["t2"]

    w1p = jnp.zeros((Dp, Dp), f32)
    w2p = jnp.zeros((Dp, Dp), f32)
    t1p = jnp.zeros((1, Dp), f32)
    t2p = jnp.zeros((1, Dp), f32)
    for p in range(P):                                 # block-diagonal replication
        sl = slice(p * D, (p + 1) * D)
        w1p = w1p.at[sl, sl].set(w1)
        w2p = w2p.at[sl, sl].set(w2)
        t1p = t1p.at[0, sl].set(t1)
        t2p = t2p.at[0, sl].set(t2)

    return {
        "w1": w1p.astype(compute_dtype), "t1": t1p,
        "w2": w2p.astype(compute_dtype), "t2": t2p,
        "pack": P, "dim": D, "dim_padded": Dp,
    }


# ---------------------------------------------------------------------------
# Forward wrapper
# ---------------------------------------------------------------------------
def residual_block_pallas(x, prep, *, tm=1024):
    """x: (N, D) float32 or bfloat16 (bf16 halves streamed HBM bytes).
    prep: output of prepare_params.  tm: row-tile tuning knob."""
    N, D = x.shape
    assert D == prep["dim"], "feature dim mismatch with prepared params"
    P, Dp = prep["pack"], prep["dim_padded"]

    # --- present a lane-dense (rows, Dp) view of x without extra HBM passes ----
    if P > 1 and N % P == 0:
        xk = x.reshape(N // P, P * D)                  # contiguous reshape: free
        unpack = lambda o: o.reshape(N, D)
    elif P == 1 and D == Dp:
        xk = x
        unpack = lambda o: o
    else:
        # Rare fallback for awkward shapes; costs one extra HBM pass over x/out.
        # TODO(synk): fold this padding into the kernel for odd N/D if it matters.
        Np = _round_up(N, P)
        xf = jnp.zeros((Np, D), x.dtype).at[:N, :].set(x)
        if P > 1:
            xk = xf.reshape(Np // P, P * D)
            unpack = lambda o: o.reshape(Np, D)[:N]
        else:
            xk = jnp.zeros((Np, Dp), x.dtype).at[:, :D].set(xf)
            unpack = lambda o: o[:N, :D]

    rows = xk.shape[0]
    tm = _choose_tm(rows, tm)
    grid = (pl.cdiv(rows, tm),)                        # ragged last tile handled by Pallas

    row_spec = pl.BlockSpec((tm, Dp), lambda i: (i, 0))
    mat_spec = pl.BlockSpec((Dp, Dp), lambda i: (0, 0))   # VMEM-resident weights
    vec_spec = pl.BlockSpec((1, Dp), lambda i: (0, 0))
    # (For very large D, mat_spec should become K/N-blocked with a reduction axis;
    #  at Dp=128 fully-resident weights are the right call.)

    xbytes = jnp.dtype(x.dtype).itemsize
    wbytes = jnp.dtype(prep["w1"].dtype).itemsize
    vmem_need = (2 * tm * Dp * xbytes              # input tile, double-buffered
                 + 2 * tm * Dp * xbytes            # output tile, double-buffered
                 + 2 * 2 * Dp * Dp * wbytes        # two weight mats (pipeline buffers)
                 + 2 * 2 * Dp * 4                  # two shift vectors
                 + 2 * tm * Dp * 4)                # f32 intermediates headroom
    cap = _vmem_cap_bytes()
    vmem_limit = int(min(max(vmem_need * 5 // 4, 32 * 1024 * 1024),
                         int(cap * 0.85)))

    cost = pl.CostEstimate(
        flops=2 * 2 * rows * Dp * Dp,
        transcendentals=0,
        bytes_accessed=(2 * rows * Dp * xbytes       # x in, out
                        + 2 * Dp * Dp * wbytes       # weights
                        + 2 * Dp * 4),               # shift vectors
    )

    out = pl.pallas_call(
        residual_block_kernel,
        out_shape=jax.ShapeDtypeStruct((rows, Dp), x.dtype),
        grid_spec=pltpu.PrefetchScalarGridSpec(
            num_scalar_prefetch=0,
            grid=grid,
            in_specs=[row_spec, mat_spec, vec_spec, mat_spec, vec_spec],
            out_specs=row_spec,
        ),
        compiler_params=pltpu.CompilerParams(
            dimension_semantics=("parallel",),
            vmem_limit_bytes=vmem_limit,
        ),
        cost_estimate=cost,
    )(xk, prep["w1"], prep["t1"], prep["w2"], prep["t2"])

    return unpack(out)


# ---------------------------------------------------------------------------
# Synthetic parameters + pure-JAX reference
# ---------------------------------------------------------------------------
def make_params(key, dim, eps=1e-5):
    """Deterministic synthetic parameters matching the PyTorch module shapes."""
    ks = jax.random.split(key, 12)
    w1 = jax.random.normal(ks[0], (dim, dim), jnp.float32) * 0.05
    b1 = jax.random.normal(ks[1], (dim,), jnp.float32) * 0.05
    w2 = jax.random.normal(ks[2], (dim, dim), jnp.float32) * 0.05
    b2 = jax.random.normal(ks[3], (dim,), jnp.float32) * 0.05
    g1 = 1.0 + 0.1 * jax.random.normal(ks[4], (dim,), jnp.float32)
    be1 = 0.1 * jax.random.normal(ks[5], (dim,), jnp.float32)
    rm1 = 0.1 * jax.random.normal(ks[6], (dim,), jnp.float32)
    rv1 = 1.0 + 0.1 * jax.random.uniform(ks[7], (dim,), jnp.float32)
    g2 = 1.0 + 0.1 * jax.random.normal(ks[8], (dim,), jnp.float32)
    be2 = 0.1 * jax.random.normal(ks[9], (dim,), jnp.float32)
    rm2 = 0.1 * jax.random.normal(ks[10], (dim,), jnp.float32)
    rv2 = 1.0 + 0.1 * jax.random.uniform(ks[11], (dim,), jnp.float32)

    sc1 = g1 / jnp.sqrt(rv1 + eps)
    sh1 = be1 - rm1 * sc1
    sc2 = g2 / jnp.sqrt(rv2 + eps)
    sh2 = be2 - rm2 * sc2

    return {
        "w1t": w1.T, "s1": sc1, "t1": b1 * sc1 + sh1,
        "w2t": w2.T, "s2": sc2, "t2": b2 * sc2 + sh2,
    }


def residual_block_ref(x, params):
    """Pure-JAX f32 reference (eval-mode module forward)."""
    h1 = jnp.maximum(x @ params["w1t"] * params["s1"] + params["t1"], 0.0)
    h2 = h1 @ params["w2t"] * params["s2"] + params["t2"]
    return jnp.maximum(x + h2, 0.0)


if __name__ == "__main__":
    dim = 64       # feature dimension ("dim" in the module)
    batch = 256    # packs to 128 rows x 128 lanes -> 2 grid steps (both v7x cores)
    key = jax.random.PRNGKey(0)
    kx, kp = jax.random.split(key)

    x = jax.random.normal(kx, (batch, dim), jnp.float32)
    params = make_params(kp, dim)
    ref = residual_block_ref(x, params)

    # f32 MXU operands + f32 streamed activations: tight check of the fused math.
    prep_f32 = prepare_params(params, dim, compute_dtype=jnp.float32)
    out_f32 = jax.block_until_ready(residual_block_pallas(x, prep_f32, tm=1024))
    assert out_f32.shape == (batch, dim)
    err_f32 = jnp.max(jnp.abs(out_f32 - ref))
    assert jnp.allclose(out_f32, ref, atol=2e-3, rtol=2e-3), f"f32 max err {err_f32}"

    # bf16 MXU operands + bf16 streamed activations (fast config: half the HBM bytes).
    prep_bf16 = prepare_params(params, dim, compute_dtype=jnp.bfloat16)
    x_bf16 = x.astype(jnp.bfloat16)   # cast once upstream; callers keep activations bf16
    out_bf16 = jax.block_until_ready(residual_block_pallas(x_bf16, prep_bf16, tm=1024))
    assert out_bf16.shape == (batch, dim)
    out_bf16 = out_bf16.astype(jnp.float32)
    err_bf16 = jnp.max(jnp.abs(out_bf16 - ref))
    assert jnp.allclose(out_bf16, ref, atol=5e-2, rtol=5e-2), f"bf16 max err {err_bf16}"

    print("KERNEL_OK")
</pallas_src>

<mosaic_0001>
module attributes {stable_mosaic.version = 11 : i64} {
  func.func @residual_block_kernel(%arg0: i32, %arg1: memref<64x128xf32, #tpu.memory_space<vmem>>, %arg2: memref<128x128xf32, #tpu.memory_space<vmem>>, %arg3: memref<1x128xf32, #tpu.memory_space<vmem>>, %arg4: memref<128x128xf32, #tpu.memory_space<vmem>>, %arg5: memref<1x128xf32, #tpu.memory_space<vmem>>, %arg6: memref<64x128xf32, #tpu.memory_space<vmem>>) attributes {dimension_semantics = [#tpu.dimension_semantics<parallel>], iteration_bounds = array<i64: 2>, scalar_prefetch = 0 : i64, scratch_operands = 0 : i64, tpu.core_type = #tpu.core_type<tc>, window_params = [{transform_indices = @transform_0, window_bounds = array<i64: 64, 128>}, {pipeline_mode = #tpu.pipeline_mode<synchronous>, transform_indices = @transform_1, window_bounds = array<i64: 128, 128>}, {pipeline_mode = #tpu.pipeline_mode<synchronous>, transform_indices = @transform_2, window_bounds = array<i64: 1, 128>}, {pipeline_mode = #tpu.pipeline_mode<synchronous>, transform_indices = @transform_3, window_bounds = array<i64: 128, 128>}, {pipeline_mode = #tpu.pipeline_mode<synchronous>, transform_indices = @transform_4, window_bounds = array<i64: 1, 128>}, {transform_indices = @transform_5, window_bounds = array<i64: 64, 128>}]} {
    %c0 = arith.constant 0 : index
    %c0_0 = arith.constant 0 : index
    %0 = vector.load %arg1[%c0, %c0_0] : memref<64x128xf32, #tpu.memory_space<vmem>>, vector<64x128xf32>
    %c0_1 = arith.constant 0 : index
    %c0_2 = arith.constant 0 : index
    %1 = vector.load %arg2[%c0_1, %c0_2] : memref<128x128xf32, #tpu.memory_space<vmem>>, vector<128x128xf32>
    %cst = arith.constant dense<0.000000e+00> : vector<64x128xf32>
    %2 = tpu.matmul %0, %1, %cst {dimension_numbers = #tpu.dot_dimension_numbers<[1], [0], [0], [1], [0, 0, 1, 1], [], []>} : vector<64x128xf32>, vector<128x128xf32>, vector<64x128xf32> -> vector<64x128xf32>
    %c0_3 = arith.constant 0 : index
    %c0_4 = arith.constant 0 : index
    %3 = vector.load %arg3[%c0_3, %c0_4] : memref<1x128xf32, #tpu.memory_space<vmem>>, vector<1x128xf32>
    %4 = vector.broadcast %3 : vector<1x128xf32> to vector<64x128xf32>
    %5 = arith.addf %2, %4 : vector<64x128xf32>
    %cst_5 = arith.constant 0.000000e+00 : f32
    %6 = vector.broadcast %cst_5 : f32 to vector<64x128xf32>
    %7 = arith.maximumf %5, %6 : vector<64x128xf32>
    %c0_6 = arith.constant 0 : index
    %c0_7 = arith.constant 0 : index
    %8 = vector.load %arg4[%c0_6, %c0_7] : memref<128x128xf32, #tpu.memory_space<vmem>>, vector<128x128xf32>
    %cst_8 = arith.constant dense<0.000000e+00> : vector<64x128xf32>
    %9 = tpu.matmul %7, %8, %cst_8 {dimension_numbers = #tpu.dot_dimension_numbers<[1], [0], [0], [1], [0, 0, 1, 1], [], []>} : vector<64x128xf32>, vector<128x128xf32>, vector<64x128xf32> -> vector<64x128xf32>
    %c0_9 = arith.constant 0 : index
    %c0_10 = arith.constant 0 : index
    %10 = vector.load %arg5[%c0_9, %c0_10] : memref<1x128xf32, #tpu.memory_space<vmem>>, vector<1x128xf32>
    %11 = vector.broadcast %10 : vector<1x128xf32> to vector<64x128xf32>
    %12 = arith.addf %9, %11 : vector<64x128xf32>
    %13 = arith.addf %0, %12 : vector<64x128xf32>
    %cst_11 = arith.constant 0.000000e+00 : f32
    %14 = vector.broadcast %cst_11 : f32 to vector<64x128xf32>
    %15 = arith.maximumf %13, %14 : vector<64x128xf32>
    %c0_12 = arith.constant 0 : index
    %c0_13 = arith.constant 0 : index
    %16 = vector.load %arg6[%c0_12, %c0_13] : memref<64x128xf32, #tpu.memory_space<vmem>>, vector<64x128xf32>
    tpu.vector_store %arg6[%c0_12, %c0_13], %15 {strides = array<i32>} : memref<64x128xf32, #tpu.memory_space<vmem>>, vector<64x128xf32>,
    return
  }
  func.func @transform_0(%arg0: i32) -> (i32, i32) {
    %c0_i32 = arith.constant 0 : i32
    %c0_i32_0 = arith.constant 0 : i32
    return %arg0, %c0_i32 : i32, i32
  }
  func.func @transform_1(%arg0: i32) -> (i32, i32) {
    %c0_i32 = arith.constant 0 : i32
    %c0_i32_0 = arith.constant 0 : i32
    %c0_i32_1 = arith.constant 0 : i32
    return %c0_i32, %c0_i32_0 : i32, i32
  }
  func.func @transform_2(%arg0: i32) -> (i32, i32) {
    %c0_i32 = arith.constant 0 : i32
    %c0_i32_0 = arith.constant 0 : i32
    %c0_i32_1 = arith.constant 0 : i32
    return %c0_i32, %c0_i32_0 : i32, i32
  }
  func.func @transform_3(%arg0: i32) -> (i32, i32) {
    %c0_i32 = arith.constant 0 : i32
    %c0_i32_0 = arith.constant 0 : i32
    %c0_i32_1 = arith.constant 0 : i32
    return %c0_i32, %c0_i32_0 : i32, i32
  }
  func.func @transform_4(%arg0: i32) -> (i32, i32) {
    %c0_i32 = arith.constant 0 : i32
    %c0_i32_0 = arith.constant 0 : i32
    %c0_i32_1 = arith.constant 0 : i32
    return %c0_i32, %c0_i32_0 : i32, i32
  }
  func.func @transform_5(%arg0: i32) -> (i32, i32) {
    %c0_i32 = arith.constant 0 : i32
    %c0_i32_0 = arith.constant 0 : i32
    return %arg0, %c0_i32 : i32, i32
  }
}

</mosaic_0001>

<llo_original>
// kernel: tpu_custom_call.1
$region0: #{tpu_custom_call.1}
  #allocation0 [shape = 'u32[]', space=smem, size = 0x4, offset = 0x4, fixed_abs, tag = 'smem constant byte address 0x4 - core index']
  #allocation1 [shape = 'u32[144,128]{1,0:T(1,128)}', space=vmem, size = 0x12000, scoped, tag = 'internal scratch']
  %s0 = inlined_call_operand.hbm [shape: f32[128,128], index: 0, kind: input, shape index: {}]
  %s1 = inlined_call_operand.hbm [shape: f32[128,128], index: 1, kind: input, shape index: {}]
  %s2 = inlined_call_operand.vmem [shape: f32[1,128], index: 2, kind: input, shape index: {}]
  %s3 = inlined_call_operand.hbm [shape: f32[128,128], index: 3, kind: input, shape index: {}]
  %s4 = inlined_call_operand.vmem [shape: f32[1,128], index: 4, kind: input, shape index: {}]
  %s5 = inlined_call_operand.hbm [shape: f32[128,128], index: 5, kind: output, shape index: {}]
  %s6 = sld [smem:[#allocation0]]
  $region65: #{tpu_custom_call.1} parent=0
    _
  %s8 = ssub.s32 1, %s6
  %s9 = scalar_select 0, %s8, %s6
  $region1: #{tpu_custom_call.1} parent=0
    #allocation2 [shape = 'u8[65536]{0}', space=vmem, size = 0x10000, scoped, tag = 'input window, operand 0']
    #allocation3 [shape = 's32[2]{0}', space=sflag, size = 0x8, scoped, tag = 'scoped memory for tpu_custom_call.1']
    #allocation4 [shape = 's32[2]{0}', space=sflag, size = 0x8, scoped, tag = 'scoped memory for tpu_custom_call.1']
    #allocation5 [shape = 'u8[65536]{0}', space=vmem, size = 0x10000, scoped, tag = 'input window, operand 1, single buffered']
    #allocation6 [shape = 's32[1]{0}', space=sflag, size = 0x4, scoped, tag = 'scoped memory for tpu_custom_call.1']
    #allocation7 [shape = 'u8[65536]{0}', space=vmem, size = 0x10000, scoped, tag = 'input window, operand 3, single buffered']
    #allocation8 [shape = 'u8[65536]{0}', space=vmem, size = 0x10000, scoped, tag = 'output window, operand 0']
    %10 = vsyncpa [#allocation3], 0
    %s11 = scalar_lea.sflag [#allocation3], 1
    %12 = vsyncpa %s11, 0
    %13 = vsyncpa [#allocation6], 0
    %14 = vsyncpa [#allocation4], 0
    %s15 = scalar_lea.sflag [#allocation4], 1
    %16 = vsyncpa %s15, 0
    loop: start=0, step=1, limit=4
    $region2: #{tpu_custom_call.1} parent=1 // loop_pre_header
      _
    $region3: #{tpu_custom_call.1} parent=1 // loop_header
      %s18 = sphi 0, %s22
      %p19 = scmp.ge.s32.totalorder %s18, 4
      %s28 = sphi 0, %s30
      %s31 = sphi 0, %s28
      %s32 = sphi 0, %s31
      %s48 = sphi 0, %s32
      %s52 = sphi 0, %s52
      %s54 = sphi 0, %s52
      %s55 = sphi 0, %s54
      %s69 = sphi 0, %s55
      %s73 = sphi 0, %s73
      %s75 = sphi 0, %s73
      %s76 = sphi 0, %s75
      %s90 = sphi 0, %s76
      %s94 = sphi 0, %s94
      %s96 = sphi 0, %s94
      %s97 = sphi 0, %s96
      %s111 = sphi 0, %s97
      %s115 = sphi 0, %s115
      %s117 = sphi 0, %s115
      %s118 = sphi 0, %s117
      %s132 = sphi 0, %s118
      %s138 = sphi 0, %s140
      %s141 = sphi 0, %s138
      %s142 = sphi 0, %s141
      %s158 = sphi 0, %s142
    $region4: #{tpu_custom_call.1} parent=1 // loop_header_branch
      %21 = sbr.rel (%p19) target = $region8
    $region5: #{tpu_custom_call.1} parent=1 // loop_body
      %s23 = ssub.s32 %s18, 1
      %s24 = ssub.s32 %s18, 2
      %s25 = sadd.s32 %s18, 1
      %s26 = ssub.s32 %s18, %s25
      %p27 = scmp.eq.s32.totalorder %s26, 0
      %s29 = sadd.s32 %s28, 1
      %s30 = scalar_select %p27, %s28, %s29
      %p33 = pneg %p27
      %p34 = scmp.eq.s32.totalorder %s18, 1
      %p35 = por %p33, %p34
      %p36 = scmp.ne.s32.totalorder %s28, %s31
      %p37 = scmp.eq.s32.totalorder %s18, 0
      %p38 = por %p36, %p37
      %p39 = scmp.ne.s32.totalorder %s28, %s31
      %p40 = scmp.eq.s32.totalorder %s23, 1
      %p41 = por %p39, %p40
      %p42 = scmp.ne.s32.totalorder %s31, %s32
      %p43 = scmp.eq.s32.totalorder %s23, 0
      %p44 = por %p42, %p43
      %p45 = scmp.ne.s32.totalorder %s31, %s32
      %p46 = scmp.eq.s32.totalorder %s24, 1
      %p47 = por %p45, %p46
      %p49 = scmp.ne.s32.totalorder %s32, %s48
      %p50 = scmp.eq.s32.totalorder %s24, 0
      %p51 = por %p49, %p50
      %s53 = sadd.s32 %s52, 1
      %p56 = scmp.eq.s32.totalorder %s18, 1
      %p57 = scmp.ne.s32.totalorder %s52, %s54
      %p58 = scmp.eq.s32.totalorder %s18, 0
      %p59 = por %p57, %p58
      %p60 = scmp.ne.s32.totalorder %s52, %s54
      %p61 = scmp.eq.s32.totalorder %s23, 1
      %p62 = por %p60, %p61
      %p63 = scmp.ne.s32.totalorder %s54, %s55
      %p64 = scmp.eq.s32.totalorder %s23, 0
      %p65 = por %p63, %p64
      %p66 = scmp.ne.s32.totalorder %s54, %s55
      %p67 = scmp.eq.s32.totalorder %s24, 1
      %p68 = por %p66, %p67
      %p70 = scmp.ne.s32.totalorder %s55, %s69
      %p71 = scmp.eq.s32.totalorder %s24, 0
      %p72 = por %p70, %p71
      %s74 = sadd.s32 %s73, 1
      %p77 = scmp.eq.s32.totalorder %s18, 1
      %p78 = scmp.ne.s32.totalorder %s73, %s75
      %p79 = scmp.eq.s32.totalorder %s18, 0
      %p80 = por %p78, %p79
      %p81 = scmp.ne.s32.totalorder %s73, %s75
      %p82 = scmp.eq.s32.totalorder %s23, 1
      %p83 = por %p81, %p82
      %p84 = scmp.ne.s32.totalorder %s75, %s76
      %p85 = scmp.eq.s32.totalorder %s23, 0
      %p86 = por %p84, %p85
      %p87 = scmp.ne.s32.totalorder %s75, %s76
      %p88 = scmp.eq.s32.totalorder %s24, 1
      %p89 = por %p87, %p88
      %p91 = scmp.ne.s32.totalorder %s76, %s90
      %p92 = scmp.eq.s32.totalorder %s24, 0
      %p93 = por %p91, %p92
      %s95 = sadd.s32 %s94, 1
      %p98 = scmp.eq.s32.totalorder %s18, 1
      %p99 = scmp.ne.s32.totalorder %s94, %s96
      %p100 = scmp.eq.s32.totalorder %s18, 0
      %p101 = por %p99, %p100
      %p102 = scmp.ne.s32.totalorder %s94, %s96
      %p103 = scmp.eq.s32.totalorder %s23, 1
      %p104 = por %p102, %p103
      %p105 = scmp.ne.s32.totalorder %s96, %s97
      %p106 = scmp.eq.s32.totalorder %s23, 0
      %p107 = por %p105, %p106
      %p108 = scmp.ne.s32.totalorder %s96, %s97
      %p109 = scmp.eq.s32.totalorder %s24, 1
      %p110 = por %p108, %p109
      %p112 = scmp.ne.s32.totalorder %s97, %s111
      %p113 = scmp.eq.s32.totalorder %s24, 0
      %p114 = por %p112, %p113
      %s116 = sadd.s32 %s115, 1
      %p119 = scmp.eq.s32.totalorder %s18, 1
      %p120 = scmp.ne.s32.totalorder %s115, %s117
      %p121 = scmp.eq.s32.totalorder %s18, 0
      %p122 = por %p120, %p121
      %p123 = scmp.ne.s32.totalorder %s115, %s117
      %p124 = scmp.eq.s32.totalorder %s23, 1
      %p125 = por %p123, %p124
      %p126 = scmp.ne.s32.totalorder %s117, %s118
      %p127 = scmp.eq.s32.totalorder %s23, 0
      %p128 = por %p126, %p127
      %p129 = scmp.ne.s32.totalorder %s117, %s118
      %p130 = scmp.eq.s32.totalorder %s24, 1
      %p131 = por %p129, %p130
      %p133 = scmp.ne.s32.totalorder %s118, %s132
      %p134 = scmp.eq.s32.totalorder %s24, 0
      %p135 = por %p133, %p134
      %s136 = ssub.s32 %s18, %s25
      %p137 = scmp.eq.s32.totalorder %s136, 0
      %s139 = sadd.s32 %s138, 1
      %s140 = scalar_select %p137, %s138, %s139
      %p143 = pneg %p137
      %p144 = scmp.eq.s32.totalorder %s18, 1
      %p145 = por %p143, %p144
      %p146 = scmp.ne.s32.totalorder %s138, %s141
      %p147 = scmp.eq.s32.totalorder %s18, 0
      %p148 = por %p146, %p147
      %p149 = scmp.ne.s32.totalorder %s138, %s141
      %p150 = scmp.eq.s32.totalorder %s23, 1
      %p151 = por %p149, %p150
      %p152 = scmp.ne.s32.totalorder %s141, %s142
      %p153 = scmp.eq.s32.totalorder %s23, 0
      %p154 = por %p152, %p153
      %p155 = scmp.ne.s32.totalorder %s141, %s142
      %p156 = scmp.eq.s32.totalorder %s24, 1
      %p157 = por %p155, %p156
      %p159 = scmp.ne.s32.totalorder %s142, %s158
      %p160 = scmp.eq.s32.totalorder %s24, 0
      %p161 = por %p159, %p160
      %p162 = scmp.le.s32.totalorder 1, %s18
      %p163 = scmp.lt.s32.totalorder %s18, 3
      %p164 = pnand %p162, %p163
      %p165 = pneg %p164
      // Predicated region
      $region9: #{tpu_custom_call.1} parent=5 // pred_check
        _
      $region10: #{tpu_custom_call.1} parent=5 // pred_check_branch
        %167 = sbr.rel (%p164) target = $region12
      $region11: #{tpu_custom_call.1} parent=5 // pred_region
        %s168 = ssub.s32 %s18, 1
        // Predicated region
        $region13: #{tpu_custom_call.1} parent=11 // pred_check
          %p169 = pneg %p65
        $region14: #{tpu_custom_call.1} parent=11 // pred_check_branch
          %171 = sbr.rel (%p169) target = $region16
        $region15: #{tpu_custom_call.1} parent=11 // pred_region
          %s173 = ssub.s32 2048, 2048
          %174 = vsyncadd [#allocation6], %s173
          %s175 = sshll.u32 [#allocation5], 4
          %s176 = int_to_ptr.vmem [resolvable:$true] %s175
          %181 = dma.hbm_to_vmem [thread:$0]  %s1, 2048, %s176, [#allocation6], 128, 128, 8
        $region16: #{tpu_custom_call.1} parent=11 // pred_fallthru
          _
        // Predicated region
        $region17: #{tpu_custom_call.1} parent=11 // pred_check
          %p182 = pneg %p86
        $region18: #{tpu_custom_call.1} parent=11 // pred_check_branch
          %184 = sbr.rel (%p182) target = $region20
        $region19: #{tpu_custom_call.1} parent=11 // pred_region
          _
        $region20: #{tpu_custom_call.1} parent=11 // pred_fallthru
          _
        // Predicated region
        $region21: #{tpu_custom_call.1} parent=11 // pred_check
          %p185 = pneg %p107
        $region22: #{tpu_custom_call.1} parent=11 // pred_check_branch
          %187 = sbr.rel (%p185) target = $region24
        $region23: #{tpu_custom_call.1} parent=11 // pred_region
          %s189 = ssub.s32 2048, 2048
          %190 = vsyncadd [#allocation6], %s189
          %s191 = sshll.u32 [#allocation7], 4
          %s192 = int_to_ptr.vmem [resolvable:$true] %s191
          %197 = dma.hbm_to_vmem [thread:$0]  %s3, 2048, %s192, [#allocation6], 128, 128, 8
        $region24: #{tpu_custom_call.1} parent=11 // pred_fallthru
          _
        // Predicated region
        $region25: #{tpu_custom_call.1} parent=11 // pred_check
          %p198 = pneg %p128
        $region26: #{tpu_custom_call.1} parent=11 // pred_check_branch
          %200 = sbr.rel (%p198) target = $region28
        $region27: #{tpu_custom_call.1} parent=11 // pred_region
          _
        $region28: #{tpu_custom_call.1} parent=11 // pred_fallthru
          _
      $region12: #{tpu_custom_call.1} parent=5 // pred_fallthru
        _
      %p201 = scmp.lt.s32.totalorder %s18, 2
      // Predicated region
      $region29: #{tpu_custom_call.1} parent=5 // pred_check
        %p202 = pneg %p201
      $region30: #{tpu_custom_call.1} parent=5 // pred_check_branch
        %204 = sbr.rel (%p202) target = $region32
      $region31: #{tpu_custom_call.1} parent=5 // pred_region
        // Predicated region
        $region33: #{tpu_custom_call.1} parent=31 // pred_check
          %p205 = pneg %p38
        $region34: #{tpu_custom_call.1} parent=31 // pred_check_branch
          %207 = sbr.rel (%p205) target = $region36
        $region35: #{tpu_custom_call.1} parent=31 // pred_region
          %s208 = sand.u32 %s28, 1
          %s209 = scalar_lea.sflag [#allocation3], %s208
          %s210 = sand.u32 %s28, 1
          %s211 = smul.addr %s210, 64
          %s212 = scalar_lea.vmem [#allocation2], %s211
          %s213 = smul.u32 8, %s18
          %s215 = ssub.s32 1024, 1024
          %216 = vsyncadd %s209, %s215
          %s217 = smul.addr %s213, 128
          %s218 = scalar_lea.hbm %s0, %s217
          %s219 = sshll.u32 %s212, 4
          %s220 = int_to_ptr.vmem [resolvable:$true] %s219
          %225 = dma.hbm_to_vmem [thread:$0]  %s218, 1024, %s220, %s209, 128, 128, 8
        $region36: #{tpu_custom_call.1} parent=31 // pred_fallthru
          _
      $region32: #{tpu_custom_call.1} parent=5 // pred_fallthru
        _
      %p226 = scmp.le.s32.totalorder 1, %s18
      %p227 = scmp.lt.s32.totalorder %s18, 3
      %p228 = pnand %p226, %p227
      %p229 = pneg %p228
      // Predicated region
      $region37: #{tpu_custom_call.1} parent=5 // pred_check
        _
      $region38: #{tpu_custom_call.1} parent=5 // pred_check_branch
        %231 = sbr.rel (%p228) target = $region40
      $region39: #{tpu_custom_call.1} parent=5 // pred_region
        %s232 = ssub.s32 %s18, 1
        %s233 = sand.u32 %s31, 1
        %s234 = scalar_lea.sflag [#allocation3], %s233
        %s235 = sand.u32 %s31, 1
        %s236 = smul.addr %s235, 64
        %s237 = scalar_lea.vmem [#allocation2], %s236
        // Predicated region
        $region41: #{tpu_custom_call.1} parent=39 // pred_check
          %p238 = pneg %p44
        $region42: #{tpu_custom_call.1} parent=39 // pred_check_branch
          %240 = sbr.rel (%p238) target = $region44
        $region43: #{tpu_custom_call.1} parent=39 // pred_region
          %241 = dma.done %s234, 1024
        $region44: #{tpu_custom_call.1} parent=39 // pred_fallthru
          _
        // Predicated region
        $region45: #{tpu_custom_call.1} parent=39 // pred_check
          %p242 = pneg %p65
        $region46: #{tpu_custom_call.1} parent=39 // pred_check_branch
          %244 = sbr.rel (%p242) target = $region48
        $region47: #{tpu_custom_call.1} parent=39 // pred_region
          %245 = dma.done [#allocation6], 2048
        $region48: #{tpu_custom_call.1} parent=39 // pred_fallthru
          _
        // Predicated region
        $region49: #{tpu_custom_call.1} parent=39 // pred_check
          %p246 = pneg %p107
        $region50: #{tpu_custom_call.1} parent=39 // pred_check_branch
          %248 = sbr.rel (%p246) target = $region52
        $region51: #{tpu_custom_call.1} parent=39 // pred_region
          %249 = dma.done [#allocation6], 2048
        $region52: #{tpu_custom_call.1} parent=39 // pred_fallthru
          _
        %s250 = sand.u32 %s31, 1
        %s251 = scalar_lea.sflag [#allocation3], %s250
        %s252 = sand.u32 %s31, 1
        %s253 = smul.addr %s252, 64
        %s254 = scalar_lea.vmem [#allocation2], %s253
        %p255 = pneg %p44
        %p256 = pneg %p41
        %p257 = pneg %p65
        %p258 = pneg %p62
        %p259 = pneg %p86
        %p260 = pneg %p83
        %p261 = pneg %p107
        %p262 = pneg %p104
        %p263 = pneg %p128
        %p264 = pneg %p125
        %p265 = pneg %p154
        %p266 = pneg %p151
        %s267 = sand.u32 %s141, 1
        %s268 = scalar_lea.sflag [#allocation4], %s267
        %s269 = sand.u32 %s141, 1
        %s270 = smul.addr %s269, 64
        %s271 = scalar_lea.vmem [#allocation8], %s270
        %s272 = smul.u32 8, %s23
        %s273 = smul.u32 8, %s23
        %v274 = vld [vmem:[%s237] sm:$0xff]
        %v275 = vld [vmem:[%s237 + $0x8] sm:$0xff]
        %v276 = vld [vmem:[%s237 + $0x10] sm:$0xff]
        %v277 = vld [vmem:[%s237 + $0x18] sm:$0xff]
        %v278 = vld [vmem:[%s237 + $0x20] sm:$0xff]
        %v279 = vld [vmem:[%s237 + $0x28] sm:$0xff]
        %v280 = vld [vmem:[%s237 + $0x30] sm:$0xff]
        %v281 = vld [vmem:[%s237 + $0x38] sm:$0xff]
        %v282 = vld [vmem:[#allocation5] sm:$0xff]
        %v283 = vld [vmem:[#allocation5 + $0x8] sm:$0xff]
        %v284 = vld [vmem:[#allocation5 + $0x10] sm:$0xff]
        %v285 = vld [vmem:[#allocation5 + $0x18] sm:$0xff]
        %v286 = vld [vmem:[#allocation5 + $0x20] sm:$0xff]
        %v287 = vld [vmem:[#allocation5 + $0x28] sm:$0xff]
        %v288 = vld [vmem:[#allocation5 + $0x30] sm:$0xff]
        %v289 = vld [vmem:[#allocation5 + $0x38] sm:$0xff]
        %v290 = vld [vmem:[#allocation5 + $0x40] sm:$0xff]
        %v291 = vld [vmem:[#allocation5 + $0x48] sm:$0xff]
        %v292 = vld [vmem:[#allocation5 + $0x50] sm:$0xff]
        %v293 = vld [vmem:[#allocation5 + $0x58] sm:$0xff]
        %v294 = vld [vmem:[#allocation5 + $0x60] sm:$0xff]
        %v295 = vld [vmem:[#allocation5 + $0x68] sm:$0xff]
        %v296 = vld [vmem:[#allocation5 + $0x70] sm:$0xff]
        %v297 = vld [vmem:[#allocation5 + $0x78] sm:$0xff]
        %v298 = vld [vmem:[%s2] sm:$0x1]
        %v300 = vlaneseq
        %v301 = vshrl.u32 %v300, 7
        %v302 = vsub.s32 0, %v301
        %v303 = vrot.slane %v298, %v302
        %305 = vmatprep.subr.mxu0 0.0
        %306 = vmatpush1.msra.mxu0 %v282
        %307 = vmatprep.subr.mxu0 0.0
        %308 = vmatpush1.msra.mxu0 %v283
        %309 = vmatprep.subr.mxu0 0.0
        %310 = vmatpush1.msra.mxu0 %v284
        %311 = vmatprep.subr.mxu0 0.0
        %312 = vmatpush1.msra.mxu0 %v285
        %313 = vmatprep.subr.mxu0 0.0
        %314 = vmatpush1.msra.mxu0 %v286
        %315 = vmatprep.subr.mxu0 0.0
        %316 = vmatpush1.msra.mxu0 %v287
        %317 = vmatprep.subr.mxu0 0.0
        %318 = vmatpush1.msra.mxu0 %v288
        %319 = vmatprep.subr.mxu0 0.0
        %320 = vmatpush1.msra.mxu0 %v289
        %321 = vmatprep.subr.mxu0 0.0
        %322 = vmatpush1.msra.mxu0 %v290
        %323 = vmatprep.subr.mxu0 0.0
        %324 = vmatpush1.msra.mxu0 %v291
        %325 = vmatprep.subr.mxu0 0.0
        %326 = vmatpush1.msra.mxu0 %v292
        %327 = vmatprep.subr.mxu0 0.0
        %328 = vmatpush1.msra.mxu0 %v293
        %329 = vmatprep.subr.mxu0 0.0
        %330 = vmatpush1.msra.mxu0 %v294
        %331 = vmatprep.subr.mxu0 0.0
        %332 = vmatpush1.msra.mxu0 %v295
        %333 = vmatprep.subr.mxu0 0.0
        %334 = vmatpush1.msra.mxu0 %v296
        %335 = vmatprep.subr.mxu0 0.0
        %336 = vmatpush1.msra.mxu0 %v297
        %337 = vmatprep.subr.mxu0 0.0
        %338 = vmatpush1.msra.mxu0 0.0
        %339 = vmatprep.subr.mxu0 0.0
        %340 = vmatpush1.msra.mxu0 0.0
        %341 = vmatprep.subr.mxu0 0.0
        %342 = vmatpush1.msra.mxu0 0.0
        %343 = vmatprep.subr.mxu0 0.0
        %344 = vmatpush1.msra.mxu0 0.0
        %345 = vmatprep.subr.mxu0 0.0
        %346 = vmatpush1.msra.mxu0 0.0
        %347 = vmatprep.subr.mxu0 0.0
        %348 = vmatpush1.msra.mxu0 0.0
        %349 = vmatprep.subr.mxu0 0.0
        %350 = vmatpush1.msra.mxu0 0.0
        %351 = vmatprep.subr.mxu0 0.0
        %352 = vmatpush1.msra.mxu0 0.0
        %353 = vmatprep.subr.mxu0 0.0
        %354 = vmatpush1.msra.mxu0 0.0
        %355 = vmatprep.subr.mxu0 0.0
        %356 = vmatpush1.msra.mxu0 0.0
        %357 = vmatprep.subr.mxu0 0.0
        %358 = vmatpush1.msra.mxu0 0.0
        %359 = vmatprep.subr.mxu0 0.0
        %360 = vmatpush1.msra.mxu0 0.0
        %361 = vmatprep.subr.mxu0 0.0
        %362 = vmatpush1.msra.mxu0 0.0
        %363 = vmatprep.subr.mxu0 0.0
        %364 = vmatpush1.msra.mxu0 0.0
        %365 = vmatprep.subr.mxu0 0.0
        %366 = vmatpush1.msra.mxu0 0.0
        %367 = vmatprep.subr.mxu0 0.0
        %368 = vmatpush1.msra.mxu0 0.0
        %369 = vmatprep.mubr.f32.mxu0 0.0
        %370 = vmatmul.mubr.f32.gmra.mrb[0].mxu0 %v274
        %v371 = vpop.f32.mrb[0].mxu0
        %v372 = vadd.f32 %v303, %v371
        %v373 = vpop.f32.mrb[0].mxu0
        %374 = vmatprep.mubr.f32.mxu0 0.0
        %375 = vmatmul.mubr.f32.gmra.mrb[0].mxu0 %v275
        %v376 = vpop.f32.mrb[0].mxu0
        %v377 = vadd.f32 %v303, %v376
        %v378 = vpop.f32.mrb[0].mxu0
        %379 = vmatprep.mubr.f32.mxu0 0.0
        %380 = vmatmul.mubr.f32.gmra.mrb[0].mxu0 %v276
        %v381 = vpop.f32.mrb[0].mxu0
        %v382 = vadd.f32 %v303, %v381
        %v383 = vpop.f32.mrb[0].mxu0
        %384 = vmatprep.mubr.f32.mxu0 0.0
        %385 = vmatmul.mubr.f32.gmra.mrb[0].mxu0 %v277
        %v386 = vpop.f32.mrb[0].mxu0
        %v387 = vadd.f32 %v303, %v386
        %v388 = vpop.f32.mrb[0].mxu0
        %389 = vmatprep.mubr.f32.mxu0 0.0
        %390 = vmatmul.mubr.f32.gmra.mrb[0].mxu0 %v278
        %v391 = vpop.f32.mrb[0].mxu0
        %v392 = vadd.f32 %v303, %v391
        %v393 = vpop.f32.mrb[0].mxu0
        %394 = vmatprep.mubr.f32.mxu0 0.0
        %395 = vmatmul.mubr.f32.gmra.mrb[0].mxu0 %v279
        %v396 = vpop.f32.mrb[0].mxu0
        %v397 = vadd.f32 %v303, %v396
        %v398 = vpop.f32.mrb[0].mxu0
        %399 = vmatprep.mubr.f32.mxu0 0.0
        %400 = vmatmul.mubr.f32.gmra.mrb[0].mxu0 %v280
        %v401 = vpop.f32.mrb[0].mxu0
        %v402 = vadd.f32 %v303, %v401
        %v403 = vpop.f32.mrb[0].mxu0
        %404 = vmatprep.mubr.f32.mxu0 0.0
        %405 = vmatmul.mubr.f32.gmra.mrb[0].mxu0 %v281
        %v406 = vpop.f32.mrb[0].mxu0
        %v407 = vadd.f32 %v303, %v406
        %v408 = vpop.f32.mrb[0].mxu0
        %409 = vdwg.mxu0
        %v410 = vmax.f32 %v372, 0.0
        %v411 = vmax.f32 %v377, 0.0
        %v412 = vmax.f32 %v382, 0.0
        %v413 = vmax.f32 %v387, 0.0
        %v414 = vmax.f32 %v392, 0.0
        %v415 = vmax.f32 %v397, 0.0
        %v416 = vmax.f32 %v402, 0.0
        %v417 = vmax.f32 %v407, 0.0
        %v418 = vld [vmem:[#allocation7] sm:$0xff]
        %v419 = vld [vmem:[#allocation7 + $0x8] sm:$0xff]
        %v420 = vld [vmem:[#allocation7 + $0x10] sm:$0xff]
        %v421 = vld [vmem:[#allocation7 + $0x18] sm:$0xff]
        %v422 = vld [vmem:[#allocation7 + $0x20] sm:$0xff]
        %v423 = vld [vmem:[#allocation7 + $0x28] sm:$0xff]
        %v424 = vld [vmem:[#allocation7 + $0x30] sm:$0xff]
        %v425 = vld [vmem:[#allocation7 + $0x38] sm:$0xff]
        %v426 = vld [vmem:[#allocation7 + $0x40] sm:$0xff]
        %v427 = vld [vmem:[#allocation7 + $0x48] sm:$0xff]
        %v428 = vld [vmem:[#allocation7 + $0x50] sm:$0xff]
        %v429 = vld [vmem:[#allocation7 + $0x58] sm:$0xff]
        %v430 = vld [vmem:[#allocation7 + $0x60] sm:$0xff]
        %v431 = vld [vmem:[#allocation7 + $0x68] sm:$0xff]
        %v432 = vld [vmem:[#allocation7 + $0x70] sm:$0xff]
        %v433 = vld [vmem:[#allocation7 + $0x78] sm:$0xff]
        %v434 = vld [vmem:[%s4] sm:$0x1]
        %v436 = vlaneseq
        %v437 = vshrl.u32 %v436, 7
        %v438 = vsub.s32 0, %v437
        %v439 = vrot.slane %v434, %v438
        %441 = vmatprep.subr.mxu0 0.0
        %442 = vmatpush1.msra.mxu0 %v418
        %443 = vmatprep.subr.mxu0 0.0
        %444 = vmatpush1.msra.mxu0 %v419
        %445 = vmatprep.subr.mxu0 0.0
        %446 = vmatpush1.msra.mxu0 %v420
        %447 = vmatprep.subr.mxu0 0.0
        %448 = vmatpush1.msra.mxu0 %v421
        %449 = vmatprep.subr.mxu0 0.0
        %450 = vmatpush1.msra.mxu0 %v422
        %451 = vmatprep.subr.mxu0 0.0
        %452 = vmatpush1.msra.mxu0 %v423
        %453 = vmatprep.subr.mxu0 0.0
        %454 = vmatpush1.msra.mxu0 %v424
        %455 = vmatprep.subr.mxu0 0.0
        %456 = vmatpush1.msra.mxu0 %v425
        %457 = vmatprep.subr.mxu0 0.0
        %458 = vmatpush1.msra.mxu0 %v426
        %459 = vmatprep.subr.mxu0 0.0
        %460 = vmatpush1.msra.mxu0 %v427
        %461 = vmatprep.subr.mxu0 0.0
        %462 = vmatpush1.msra.mxu0 %v428
        %463 = vmatprep.subr.mxu0 0.0
        %464 = vmatpush1.msra.mxu0 %v429
        %465 = vmatprep.subr.mxu0 0.0
        %466 = vmatpush1.msra.mxu0 %v430
        %467 = vmatprep.subr.mxu0 0.0
        %468 = vmatpush1.msra.mxu0 %v431
        %469 = vmatprep.subr.mxu0 0.0
        %470 = vmatpush1.msra.mxu0 %v432
        %471 = vmatprep.subr.mxu0 0.0
        %472 = vmatpush1.msra.mxu0 %v433
        %473 = vmatprep.subr.mxu0 0.0
        %474 = vmatpush1.msra.mxu0 0.0
        %475 = vmatprep.subr.mxu0 0.0
        %476 = vmatpush1.msra.mxu0 0.0
        %477 = vmatprep.subr.mxu0 0.0
        %478 = vmatpush1.msra.mxu0 0.0
        %479 = vmatprep.subr.mxu0 0.0
        %480 = vmatpush1.msra.mxu0 0.0
        %481 = vmatprep.subr.mxu0 0.0
        %482 = vmatpush1.msra.mxu0 0.0
        %483 = vmatprep.subr.mxu0 0.0
        %484 = vmatpush1.msra.mxu0 0.0
        %485 = vmatprep.subr.mxu0 0.0
        %486 = vmatpush1.msra.mxu0 0.0
        %487 = vmatprep.subr.mxu0 0.0
        %488 = vmatpush1.msra.mxu0 0.0
        %489 = vmatprep.subr.mxu0 0.0
        %490 = vmatpush1.msra.mxu0 0.0
        %491 = vmatprep.subr.mxu0 0.0
        %492 = vmatpush1.msra.mxu0 0.0
        %493 = vmatprep.subr.mxu0 0.0
        %494 = vmatpush1.msra.mxu0 0.0
        %495 = vmatprep.subr.mxu0 0.0
        %496 = vmatpush1.msra.mxu0 0.0
        %497 = vmatprep.subr.mxu0 0.0
        %498 = vmatpush1.msra.mxu0 0.0
        %499 = vmatprep.subr.mxu0 0.0
        %500 = vmatpush1.msra.mxu0 0.0
        %501 = vmatprep.subr.mxu0 0.0
        %502 = vmatpush1.msra.mxu0 0.0
        %503 = vmatprep.subr.mxu0 0.0
        %504 = vmatpush1.msra.mxu0 0.0
        %505 = vmatprep.mubr.f32.mxu0 0.0
        %506 = vmatmul.mubr.f32.gmra.mrb[0].mxu0 %v410
        %v507 = vpop.f32.mrb[0].mxu0
        %v508 = vadd.f32 %v439, %v507
        %v509 = vpop.f32.mrb[0].mxu0
        %510 = vmatprep.mubr.f32.mxu0 0.0
        %511 = vmatmul.mubr.f32.gmra.mrb[0].mxu0 %v411
        %v512 = vpop.f32.mrb[0].mxu0
        %v513 = vadd.f32 %v439, %v512
        %v514 = vpop.f32.mrb[0].mxu0
        %515 = vmatprep.mubr.f32.mxu0 0.0
        %516 = vmatmul.mubr.f32.gmra.mrb[0].mxu0 %v412
        %v517 = vpop.f32.mrb[0].mxu0
        %v518 = vadd.f32 %v439, %v517
        %v519 = vpop.f32.mrb[0].mxu0
        %520 = vmatprep.mubr.f32.mxu0 0.0
        %521 = vmatmul.mubr.f32.gmra.mrb[0].mxu0 %v413
        %v522 = vpop.f32.mrb[0].mxu0
        %v523 = vadd.f32 %v439, %v522
        %v524 = vpop.f32.mrb[0].mxu0
        %525 = vmatprep.mubr.f32.mxu0 0.0
        %526 = vmatmul.mubr.f32.gmra.mrb[0].mxu0 %v414
        %v527 = vpop.f32.mrb[0].mxu0
        %v528 = vadd.f32 %v439, %v527
        %v529 = vpop.f32.mrb[0].mxu0
        %530 = vmatprep.mubr.f32.mxu0 0.0
        %531 = vmatmul.mubr.f32.gmra.mrb[0].mxu0 %v415
        %v532 = vpop.f32.mrb[0].mxu0
        %v533 = vadd.f32 %v439, %v532
        %v534 = vpop.f32.mrb[0].mxu0
        %535 = vmatprep.mubr.f32.mxu0 0.0
        %536 = vmatmul.mubr.f32.gmra.mrb[0].mxu0 %v416
        %v537 = vpop.f32.mrb[0].mxu0
        %v538 = vadd.f32 %v439, %v537
        %v539 = vpop.f32.mrb[0].mxu0
        %540 = vmatprep.mubr.f32.mxu0 0.0
        %541 = vmatmul.mubr.f32.gmra.mrb[0].mxu0 %v417
        %v542 = vpop.f32.mrb[0].mxu0
        %v543 = vadd.f32 %v439, %v542
        %v544 = vpop.f32.mrb[0].mxu0
        %545 = vdwg.mxu0
        %v546 = vadd.f32 %v274, %v508
        %v547 = vadd.f32 %v275, %v513
        %v548 = vadd.f32 %v276, %v518
        %v549 = vadd.f32 %v277, %v523
        %v550 = vadd.f32 %v278, %v528
        %v551 = vadd.f32 %v279, %v533
        %v552 = vadd.f32 %v280, %v538
        %v553 = vadd.f32 %v281, %v543
        %v554 = vmax.f32 %v546, 0.0
        %v555 = vmax.f32 %v547, 0.0
        %v556 = vmax.f32 %v548, 0.0
        %v557 = vmax.f32 %v549, 0.0
        %v558 = vmax.f32 %v550, 0.0
        %v559 = vmax.f32 %v551, 0.0
        %v560 = vmax.f32 %v552, 0.0
        %v561 = vmax.f32 %v553, 0.0
        %562 = vst [vmem:[%s271] sm:$0xff] %v554
        %563 = vst [vmem:[%s271 + $0x8] sm:$0xff] %v555
        %564 = vst [vmem:[%s271 + $0x10] sm:$0xff] %v556
        %565 = vst [vmem:[%s271 + $0x18] sm:$0xff] %v557
        %566 = vst [vmem:[%s271 + $0x20] sm:$0xff] %v558
        %567 = vst [vmem:[%s271 + $0x28] sm:$0xff] %v559
        %568 = vst [vmem:[%s271 + $0x30] sm:$0xff] %v560
        %569 = vst [vmem:[%s271 + $0x38] sm:$0xff] %v561
        %s570 = sand.u32 %s141, 1
        %s571 = scalar_lea.sflag [#allocation4], %s570
        %s572 = sand.u32 %s141, 1
        %s573 = smul.addr %s572, 64
        %s574 = scalar_lea.vmem [#allocation8], %s573
        // Predicated region
        $region53: #{tpu_custom_call.1} parent=39 // pred_check
          %p575 = pneg %p151
        $region54: #{tpu_custom_call.1} parent=39 // pred_check_branch
          %577 = sbr.rel (%p575) target = $region56
        $region55: #{tpu_custom_call.1} parent=39 // pred_region
          %s578 = smul.u32 8, %s23
          %s580 = ssub.s32 1024, 1024
          %581 = vsyncadd %s571, %s580
          %s582 = smul.addr %s578, 128
          %s583 = scalar_lea.hbm %s5, %s582
          %s584 = sshll.u32 %s574, 4
          %s585 = int_to_ptr.vmem [resolvable:$true] %s584
          %590 = dma.vmem_to_hbm [thread:$0]  %s585, 1024, %s583, %s571, 128, 128, 8
        $region56: #{tpu_custom_call.1} parent=39 // pred_fallthru
          _
      $region40: #{tpu_custom_call.1} parent=5 // pred_fallthru
        _
      %p591 = scmp.le.s32.totalorder 2, %s18
      // Predicated region
      $region57: #{tpu_custom_call.1} parent=5 // pred_check
        %p592 = pneg %p591
      $region58: #{tpu_custom_call.1} parent=5 // pred_check_branch
        %594 = sbr.rel (%p592) target = $region60
      $region59: #{tpu_custom_call.1} parent=5 // pred_region
        %s595 = ssub.s32 %s18, 2
        // Predicated region
        $region61: #{tpu_custom_call.1} parent=59 // pred_check
          %p596 = pneg %p157
        $region62: #{tpu_custom_call.1} parent=59 // pred_check_branch
          %598 = sbr.rel (%p596) target = $region64
        $region63: #{tpu_custom_call.1} parent=59 // pred_region
          %s599 = sand.u32 %s142, 1
          %s600 = scalar_lea.sflag [#allocation4], %s599
          %s601 = sand.u32 %s142, 1
          %s602 = smul.addr %s601, 64
          %s603 = scalar_lea.vmem [#allocation8], %s602
          %604 = dma.done %s600, 1024
        $region64: #{tpu_custom_call.1} parent=59 // pred_fallthru
          _
      $region60: #{tpu_custom_call.1} parent=5 // pred_fallthru
        _
    $region6: #{tpu_custom_call.1} parent=1 // loop_footer
      %s22 = sadd.s32 1, %s18
    $region7: #{tpu_custom_call.1} parent=1 // loop_footer_branch
      %17 = sbr.rel target = $region3
    $region8: #{tpu_custom_call.1} parent=1 // loop_exit
      _
    %605 = vsyncpa [#allocation3], 1
    %s606 = scalar_lea.sflag [#allocation3], 1
    %607 = vsyncpa %s606, 1
    %608 = vsyncpa [#allocation6], 1
    %609 = vsyncpa [#allocation4], 1
    %s610 = scalar_lea.sflag [#allocation4], 1
    %611 = vsyncpa %s610, 1

</llo_original>
